<compile_context>
chip_gen: v7x
topology: tpu7x:2x2x1
jax: 0.10.0
libtpu: 0.0.40
codegen_flags: <defaults>
</compile_context>

<pallas_src>
import functools

import jax
import jax.numpy as jnp
from jax.experimental import pallas as pl
from jax.experimental.pallas import tpu as pltpu


def _mlp_actor_kernel(obs_ref, avail_ref,
                      w1_ref, b1_ref, w2_ref, b2_ref, w3_ref, b3_ref,
                      out_ref):
    """Fused 3-layer MLP + avail-action masking for one row tile."""
    x = obs_ref[...]                                                       # bf16 [TM, OBS]
    h1 = jnp.dot(x, w1_ref[...], preferred_element_type=jnp.float32)      # f32  [TM, HID]
    h1 = jnp.maximum(h1 + b1_ref[...], 0.0)                               # ReLU(fc1), f32
    h2 = jnp.dot(h1.astype(jnp.bfloat16), w2_ref[...],
                 preferred_element_type=jnp.float32)
    h2 = jnp.maximum(h2 + b2_ref[...], 0.0)                               # ReLU(fc2), f32
    logits = jnp.dot(h2.astype(jnp.bfloat16), w3_ref[...],
                     preferred_element_type=jnp.float32)
    logits = logits + b3_ref[...]                                         # fc3, f32 [TM, ACT_PAD]
    masked = jnp.where(avail_ref[...] == 0.0, jnp.float32(-1e10), logits)
    out_ref[...] = masked.astype(out_ref.dtype)


def _round_up(x, m):
    return ((x + m - 1) // m) * m


@functools.partial(jax.jit, static_argnames=("tile_m",))
def mir3_actor_forward(obs, hidden_state, avail_actions, params, tile_m=512):
    """Runs the shared-params MLP actor over [B, N, obs_dim] observations."""
    w1, b1, w2, b2, w3, b3 = params
    B, N, obs_dim = obs.shape
    hidden_dim = w1.shape[1]
    action_dim = w3.shape[1]
    act_pad = _round_up(action_dim, 128)          # lane-dense output width

    rows = B * N
    # Big row tiles for large B*N; clamp (to a sublane multiple) for small problems.
    tile_m_eff = min(tile_m, _round_up(rows, 8))
    grid = (pl.cdiv(rows, tile_m_eff),)           # ragged last tile handled by Pallas

    # Streamed inputs: obs as bf16 (halves HBM read), avail padded to 128 lanes (pad=1 => unmasked).
    obs2 = obs.reshape(rows, obs_dim).astype(jnp.bfloat16)
    if avail_actions is None:
        avail2 = jnp.ones((rows, act_pad), jnp.float32)
    else:
        avail2 = avail_actions.reshape(rows, action_dim).astype(jnp.float32)
        avail2 = jnp.pad(avail2, ((0, 0), (0, act_pad - action_dim)),
                         constant_values=1.0)

    # Resident (tiny) weights: bf16 for MXU; biases stay f32. w3/b3 lane-padded to act_pad.
    w1b = w1.astype(jnp.bfloat16)
    w2b = w2.astype(jnp.bfloat16)
    w3b = jnp.pad(w3, ((0, 0), (0, act_pad - action_dim))).astype(jnp.bfloat16)
    b1_2d = b1.reshape(1, hidden_dim).astype(jnp.float32)
    b2_2d = b2.reshape(1, hidden_dim).astype(jnp.float32)
    b3_2d = jnp.pad(b3, (0, act_pad - action_dim)).reshape(1, act_pad).astype(jnp.float32)

    out2 = pl.pallas_call(
        _mlp_actor_kernel,
        out_shape=jax.ShapeDtypeStruct((rows, act_pad), jnp.float32),
        grid_spec=pltpu.PrefetchScalarGridSpec(
            num_scalar_prefetch=0,
            grid=grid,
            in_specs=[
                pl.BlockSpec((tile_m_eff, obs_dim), lambda i: (i, 0)),      # obs tile (bf16)
                pl.BlockSpec((tile_m_eff, act_pad), lambda i: (i, 0)),      # avail tile (f32)
                pl.BlockSpec((obs_dim, hidden_dim), lambda i: (0, 0)),      # w1 (resident)
                pl.BlockSpec((1, hidden_dim), lambda i: (0, 0)),            # b1
                pl.BlockSpec((hidden_dim, hidden_dim), lambda i: (0, 0)),   # w2
                pl.BlockSpec((1, hidden_dim), lambda i: (0, 0)),            # b2
                pl.BlockSpec((hidden_dim, act_pad), lambda i: (0, 0)),      # w3 (lane-padded)
                pl.BlockSpec((1, act_pad), lambda i: (0, 0)),               # b3 (lane-padded)
            ],
            out_specs=pl.BlockSpec((tile_m_eff, act_pad), lambda i: (i, 0)),
        ),
        compiler_params=pltpu.CompilerParams(
            dimension_semantics=("parallel",)),
    )(obs2, avail2, w1b, b1_2d, w2b, b2_2d, w3b, b3_2d)

    out = out2[:, :action_dim].reshape(B, N, action_dim)
    # MLPBase simply returns the hidden_state it was given (no RNN).
    hs = hidden_state
    return out, hs


def init_params(obs_dim, hidden_dim, action_dim, key):
    """Deterministic init mimicking nn.Linear default (uniform +/- 1/sqrt(fan_in))."""
    ks = jax.random.split(key, 6)

    def lin(kw, kb, fan_in, fan_out):
        bound = 1.0 / jnp.sqrt(jnp.float32(fan_in))
        w = jax.random.uniform(kw, (fan_in, fan_out), jnp.float32, -bound, bound)
        b = jax.random.uniform(kb, (fan_out,), jnp.float32, -bound, bound)
        return w, b

    w1, b1 = lin(ks[0], ks[1], obs_dim, hidden_dim)
    w2, b2 = lin(ks[2], ks[3], hidden_dim, hidden_dim)
    w3, b3 = lin(ks[4], ks[5], hidden_dim, action_dim)
    return (w1, b1, w2, b2, w3, b3)


def _reference_forward(obs, hidden_state, avail_actions, params):
    """Pure-JAX f32 reference of the same forward (for correctness check)."""
    w1, b1, w2, b2, w3, b3 = params
    h = jnp.maximum(obs @ w1 + b1, 0.0)
    h = jnp.maximum(h @ w2 + b2, 0.0)
    out = h @ w3 + b3
    if avail_actions is not None:
        out = jnp.where(avail_actions == 0, -1e10, out)
    return out, hidden_state


if __name__ == "__main__":
    # Small shapes consistent with the module's forward contract.
    B, N = 2, 4            # batch_size, num_agents
    OBS, HID, ACT = 16, 32, 8

    key = jax.random.PRNGKey(0)
    k_obs, k_hs, k_avail, k_par = jax.random.split(key, 4)

    obs = jax.random.normal(k_obs, (B, N, OBS), jnp.float32)
    hidden_state = jax.random.normal(k_hs, (B, N, HID), jnp.float32)
    avail_actions = (jax.random.uniform(k_avail, (B, N, ACT)) > 0.3).astype(jnp.float32)

    params = init_params(OBS, HID, ACT, k_par)

    out, hs = mir3_actor_forward(obs, hidden_state, avail_actions, params)
    out = jax.block_until_ready(out)
    hs = jax.block_until_ready(hs)

    # sanity check against pure-JAX f32 reference (kernel matmuls are bf16-in/f32-acc,
    # so use a modest tolerance; masked entries match exactly at -1e10).
    ref_out, ref_hs = _reference_forward(obs, hidden_state, avail_actions, params)
    assert out.shape == (B, N, ACT)
    assert hs.shape == (B, N, HID)
    assert jnp.allclose(out, ref_out, atol=2e-2, rtol=2e-2)
    assert jnp.array_equal(hs, ref_hs)

    # TODO(synk): RNNBase (use_rnn=True) GRU path and share_params=False per-agent
    # ModuleList variant are not implemented (their definitions are not in the provided module).
    print("KERNEL_OK")
</pallas_src>

<mosaic_0001>
module attributes {stable_mosaic.version = 11 : i64} {
  func.func @_mlp_actor_kernel(%arg0: i32, %arg1: memref<8x16xbf16, #tpu.memory_space<vmem>>, %arg2: memref<8x128xf32, #tpu.memory_space<vmem>>, %arg3: memref<16x32xbf16, #tpu.memory_space<vmem>>, %arg4: memref<1x32xf32, #tpu.memory_space<vmem>>, %arg5: memref<32x32xbf16, #tpu.memory_space<vmem>>, %arg6: memref<1x32xf32, #tpu.memory_space<vmem>>, %arg7: memref<32x128xbf16, #tpu.memory_space<vmem>>, %arg8: memref<1x128xf32, #tpu.memory_space<vmem>>, %arg9: memref<8x128xf32, #tpu.memory_space<vmem>>) attributes {dimension_semantics = [#tpu.dimension_semantics<parallel>], iteration_bounds = array<i64: 1>, scalar_prefetch = 0 : i64, scratch_operands = 0 : i64, tpu.core_type = #tpu.core_type<tc>, window_params = [{transform_indices = @transform_0, window_bounds = array<i64: 8, 16>}, {transform_indices = @transform_1, window_bounds = array<i64: 8, 128>}, {pipeline_mode = #tpu.pipeline_mode<synchronous>, transform_indices = @transform_2, window_bounds = array<i64: 16, 32>}, {pipeline_mode = #tpu.pipeline_mode<synchronous>, transform_indices = @transform_3, window_bounds = array<i64: 1, 32>}, {pipeline_mode = #tpu.pipeline_mode<synchronous>, transform_indices = @transform_4, window_bounds = array<i64: 32, 32>}, {pipeline_mode = #tpu.pipeline_mode<synchronous>, transform_indices = @transform_5, window_bounds = array<i64: 1, 32>}, {pipeline_mode = #tpu.pipeline_mode<synchronous>, transform_indices = @transform_6, window_bounds = array<i64: 32, 128>}, {pipeline_mode = #tpu.pipeline_mode<synchronous>, transform_indices = @transform_7, window_bounds = array<i64: 1, 128>}, {transform_indices = @transform_8, window_bounds = array<i64: 8, 128>}]} {
    %c0 = arith.constant 0 : index
    %c0_0 = arith.constant 0 : index
    %0 = vector.load %arg1[%c0, %c0_0] : memref<8x16xbf16, #tpu.memory_space<vmem>>, vector<8x16xbf16>
    %c0_1 = arith.constant 0 : index
    %c0_2 = arith.constant 0 : index
    %1 = vector.load %arg3[%c0_1, %c0_2] : memref<16x32xbf16, #tpu.memory_space<vmem>>, vector<16x32xbf16>
    %cst = arith.constant dense<0.000000e+00> : vector<8x32xf32>
    %2 = tpu.matmul %0, %1, %cst {dimension_numbers = #tpu.dot_dimension_numbers<[1], [0], [0], [1], [0, 0, 1, 1], [], []>} : vector<8x16xbf16>, vector<16x32xbf16>, vector<8x32xf32> -> vector<8x32xf32>
    %c0_3 = arith.constant 0 : index
    %c0_4 = arith.constant 0 : index
    %3 = vector.load %arg4[%c0_3, %c0_4] : memref<1x32xf32, #tpu.memory_space<vmem>>, vector<1x32xf32>
    %4 = vector.broadcast %3 : vector<1x32xf32> to vector<8x32xf32>
    %5 = arith.addf %2, %4 : vector<8x32xf32>
    %cst_5 = arith.constant 0.000000e+00 : f32
    %6 = vector.broadcast %cst_5 : f32 to vector<8x32xf32>
    %7 = arith.maximumf %5, %6 : vector<8x32xf32>
    %8 = arith.truncf %7 : vector<8x32xf32> to vector<8x32xbf16>
    %c0_6 = arith.constant 0 : index
    %c0_7 = arith.constant 0 : index
    %9 = vector.load %arg5[%c0_6, %c0_7] : memref<32x32xbf16, #tpu.memory_space<vmem>>, vector<32x32xbf16>
    %cst_8 = arith.constant dense<0.000000e+00> : vector<8x32xf32>
    %10 = tpu.matmul %8, %9, %cst_8 {dimension_numbers = #tpu.dot_dimension_numbers<[1], [0], [0], [1], [0, 0, 1, 1], [], []>} : vector<8x32xbf16>, vector<32x32xbf16>, vector<8x32xf32> -> vector<8x32xf32>
    %c0_9 = arith.constant 0 : index
    %c0_10 = arith.constant 0 : index
    %11 = vector.load %arg6[%c0_9, %c0_10] : memref<1x32xf32, #tpu.memory_space<vmem>>, vector<1x32xf32>
    %12 = vector.broadcast %11 : vector<1x32xf32> to vector<8x32xf32>
    %13 = arith.addf %10, %12 : vector<8x32xf32>
    %cst_11 = arith.constant 0.000000e+00 : f32
    %14 = vector.broadcast %cst_11 : f32 to vector<8x32xf32>
    %15 = arith.maximumf %13, %14 : vector<8x32xf32>
    %16 = arith.truncf %15 : vector<8x32xf32> to vector<8x32xbf16>
    %c0_12 = arith.constant 0 : index
    %c0_13 = arith.constant 0 : index
    %17 = vector.load %arg7[%c0_12, %c0_13] : memref<32x128xbf16, #tpu.memory_space<vmem>>, vector<32x128xbf16>
    %cst_14 = arith.constant dense<0.000000e+00> : vector<8x128xf32>
    %18 = tpu.matmul %16, %17, %cst_14 {dimension_numbers = #tpu.dot_dimension_numbers<[1], [0], [0], [1], [0, 0, 1, 1], [], []>} : vector<8x32xbf16>, vector<32x128xbf16>, vector<8x128xf32> -> vector<8x128xf32>
    %c0_15 = arith.constant 0 : index
    %c0_16 = arith.constant 0 : index
    %19 = vector.load %arg8[%c0_15, %c0_16] : memref<1x128xf32, #tpu.memory_space<vmem>>, vector<1x128xf32>
    %20 = vector.broadcast %19 : vector<1x128xf32> to vector<8x128xf32>
    %21 = arith.addf %18, %20 : vector<8x128xf32>
    %c0_17 = arith.constant 0 : index
    %c0_18 = arith.constant 0 : index
    %22 = vector.load %arg2[%c0_17, %c0_18] : memref<8x128xf32, #tpu.memory_space<vmem>>, vector<8x128xf32>
    %cst_19 = arith.constant 0.000000e+00 : f32
    %23 = vector.broadcast %cst_19 : f32 to vector<8x128xf32>
    %24 = arith.cmpf oeq, %22, %23 : vector<8x128xf32>
    %cst_20 = arith.constant -1.000000e+10 : f32
    %25 = vector.broadcast %cst_20 : f32 to vector<8x128xf32>
    %26 = arith.select %24, %25, %21 : vector<8x128xi1>, vector<8x128xf32>
    %c0_21 = arith.constant 0 : index
    %c0_22 = arith.constant 0 : index
    %27 = vector.load %arg9[%c0_21, %c0_22] : memref<8x128xf32, #tpu.memory_space<vmem>>, vector<8x128xf32>
    tpu.vector_store %arg9[%c0_21, %c0_22], %26 {strides = array<i32>} : memref<8x128xf32, #tpu.memory_space<vmem>>, vector<8x128xf32>,
    return
  }
  func.func @transform_0(%arg0: i32) -> (i32, i32) {
    %c0_i32 = arith.constant 0 : i32
    %c0_i32_0 = arith.constant 0 : i32
    return %arg0, %c0_i32 : i32, i32
  }
  func.func @transform_1(%arg0: i32) -> (i32, i32) {
    %c0_i32 = arith.constant 0 : i32
    %c0_i32_0 = arith.constant 0 : i32
    return %arg0, %c0_i32 : i32, i32
  }
  func.func @transform_2(%arg0: i32) -> (i32, i32) {
    %c0_i32 = arith.constant 0 : i32
    %c0_i32_0 = arith.constant 0 : i32
    %c0_i32_1 = arith.constant 0 : i32
    return %c0_i32, %c0_i32_0 : i32, i32
  }
  func.func @transform_3(%arg0: i32) -> (i32, i32) {
    %c0_i32 = arith.constant 0 : i32
    %c0_i32_0 = arith.constant 0 : i32
    %c0_i32_1 = arith.constant 0 : i32
    return %c0_i32, %c0_i32_0 : i32, i32
  }
  func.func @transform_4(%arg0: i32) -> (i32, i32) {
    %c0_i32 = arith.constant 0 : i32
    %c0_i32_0 = arith.constant 0 : i32
    %c0_i32_1 = arith.constant 0 : i32
    return %c0_i32, %c0_i32_0 : i32, i32
  }
  func.func @transform_5(%arg0: i32) -> (i32, i32) {
    %c0_i32 = arith.constant 0 : i32
    %c0_i32_0 = arith.constant 0 : i32
    %c0_i32_1 = arith.constant 0 : i32
    return %c0_i32, %c0_i32_0 : i32, i32
  }
  func.func @transform_6(%arg0: i32) -> (i32, i32) {
    %c0_i32 = arith.constant 0 : i32
    %c0_i32_0 = arith.constant 0 : i32
    %c0_i32_1 = arith.constant 0 : i32
    return %c0_i32, %c0_i32_0 : i32, i32
  }
  func.func @transform_7(%arg0: i32) -> (i32, i32) {
    %c0_i32 = arith.constant 0 : i32
    %c0_i32_0 = arith.constant 0 : i32
    %c0_i32_1 = arith.constant 0 : i32
    return %c0_i32, %c0_i32_0 : i32, i32
  }
  func.func @transform_8(%arg0: i32) -> (i32, i32) {
    %c0_i32 = arith.constant 0 : i32
    %c0_i32_0 = arith.constant 0 : i32
    return %arg0, %c0_i32 : i32, i32
  }
}

</mosaic_0001>

<llo_original>
// kernel: mir3_actor_forward.1
$region0: #{mir3_actor_forward.1}
  #allocation0 [shape = 'u32[]', space=smem, size = 0x4, offset = 0x4, fixed_abs, tag = 'smem constant byte address 0x4 - core index']
  #allocation1 [shape = 'u32[144,128]{1,0:T(1,128)}', space=vmem, size = 0x12000, scoped, tag = 'internal scratch']
  %s0 = inlined_call_operand.vmem [shape: bf16[8,16], index: 0, kind: input, shape index: {}]
  %s1 = inlined_call_operand.vmem [shape: f32[8,128], index: 1, kind: input, shape index: {}]
  %s2 = inlined_call_operand.vmem [shape: bf16[16,32], index: 2, kind: input, shape index: {}]
  %s3 = inlined_call_operand.vmem [shape: f32[1,32], index: 3, kind: input, shape index: {}]
  %s4 = inlined_call_operand.vmem [shape: bf16[32,32], index: 4, kind: input, shape index: {}]
  %s5 = inlined_call_operand.vmem [shape: f32[1,32], index: 5, kind: input, shape index: {}]
  %s6 = inlined_call_operand.vmem [shape: bf16[32,128], index: 6, kind: input, shape index: {}]
  %s7 = inlined_call_operand.vmem [shape: f32[1,128], index: 7, kind: input, shape index: {}]
  %s8 = inlined_call_operand.hbm [shape: f32[8,128], index: 8, kind: output, shape index: {}]
  %s9 = sld [smem:[#allocation0]]
  $region42: #{mir3_actor_forward.1} parent=0
    _
  %s11 = ssub.s32 1, %s9
  %s12 = scalar_select 0, %s11, %s9
  $region1: #{mir3_actor_forward.1} parent=0
    #allocation2 [shape = 'u8[4096]{0}', space=vmem, size = 0x1000, scoped, tag = 'output window, operand 0, single buffered']
    #allocation3 [shape = 's32[1]{0}', space=sflag, size = 0x4, scoped, tag = 'scoped memory for mir3_actor_forward.1']
    %13 = vsyncpa [#allocation3], 0
    // Predicated region
    $region2: #{mir3_actor_forward.1} parent=1 // pred_check
      _
    $region3: #{mir3_actor_forward.1} parent=1 // pred_check_branch
      %15 = sbr.rel (0) target = $region5
    $region4: #{mir3_actor_forward.1} parent=1 // pred_region
      _
    $region5: #{mir3_actor_forward.1} parent=1 // pred_fallthru
      _
    // Predicated region
    $region6: #{mir3_actor_forward.1} parent=1 // pred_check
      _
    $region7: #{mir3_actor_forward.1} parent=1 // pred_check_branch
      %17 = sbr.rel (0) target = $region9
    $region8: #{mir3_actor_forward.1} parent=1 // pred_region
      _
    $region9: #{mir3_actor_forward.1} parent=1 // pred_fallthru
      _
    // Predicated region
    $region10: #{mir3_actor_forward.1} parent=1 // pred_check
      _
    $region11: #{mir3_actor_forward.1} parent=1 // pred_check_branch
      %19 = sbr.rel (0) target = $region13
    $region12: #{mir3_actor_forward.1} parent=1 // pred_region
      _
    $region13: #{mir3_actor_forward.1} parent=1 // pred_fallthru
      _
    // Predicated region
    $region14: #{mir3_actor_forward.1} parent=1 // pred_check
      _
    $region15: #{mir3_actor_forward.1} parent=1 // pred_check_branch
      %21 = sbr.rel (0) target = $region17
    $region16: #{mir3_actor_forward.1} parent=1 // pred_region
      _
    $region17: #{mir3_actor_forward.1} parent=1 // pred_fallthru
      _
    // Predicated region
    $region18: #{mir3_actor_forward.1} parent=1 // pred_check
      _
    $region19: #{mir3_actor_forward.1} parent=1 // pred_check_branch
      %23 = sbr.rel (0) target = $region21
    $region20: #{mir3_actor_forward.1} parent=1 // pred_region
      _
    $region21: #{mir3_actor_forward.1} parent=1 // pred_fallthru
      _
    // Predicated region
    $region22: #{mir3_actor_forward.1} parent=1 // pred_check
      _
    $region23: #{mir3_actor_forward.1} parent=1 // pred_check_branch
      %25 = sbr.rel (0) target = $region25
    $region24: #{mir3_actor_forward.1} parent=1 // pred_region
      _
    $region25: #{mir3_actor_forward.1} parent=1 // pred_fallthru
      _
    // Predicated region
    $region26: #{mir3_actor_forward.1} parent=1 // pred_check
      _
    $region27: #{mir3_actor_forward.1} parent=1 // pred_check_branch
      %27 = sbr.rel (0) target = $region29
    $region28: #{mir3_actor_forward.1} parent=1 // pred_region
      _
    $region29: #{mir3_actor_forward.1} parent=1 // pred_fallthru
      _
    // Predicated region
    $region30: #{mir3_actor_forward.1} parent=1 // pred_check
      _
    $region31: #{mir3_actor_forward.1} parent=1 // pred_check_branch
      %29 = sbr.rel (0) target = $region33
    $region32: #{mir3_actor_forward.1} parent=1 // pred_region
      _
    $region33: #{mir3_actor_forward.1} parent=1 // pred_fallthru
      _
    %v31 = vld [vmem:[%s0] sm:$0xf]
    %v32 = vld [vmem:[%s2] sm:$0xf]
    %v33 = vld [vmem:[%s2 + $0x4] sm:$0xf]
    %v34 = vld [vmem:[%s3] sm:$0x1]
    %v36 = vlaneseq
    %v37 = vshrl.u32 %v36, 7
    %v38 = vsub.s32 0, %v37
    %v39 = vrot.slane %v34, %v38
    %v43 = vunpack.c.l.b16 %v32
    %v44 = vunpack.c.l.b16 %v33
    %v45 = vpack.c.b16 %v44, %v43
    %vm47 = vcmask 130048
    %v49 = vsel %vm47, %v31, 0
    %51 = vmatprep.subr.bf16.mxu0 0
    %52 = vmatpush1.bf16.msra.mxu0 %v45
    %53 = vmatprep.subr.bf16.mxu0 0
    %54 = vmatpush1.bf16.msra.mxu0 0
    %55 = vmatprep.subr.bf16.mxu0 0
    %56 = vmatpush1.bf16.msra.mxu0 0
    %57 = vmatprep.subr.bf16.mxu0 0
    %58 = vmatpush1.bf16.msra.mxu0 0
    %59 = vmatprep.subr.bf16.mxu0 0
    %60 = vmatpush1.bf16.msra.mxu0 0
    %61 = vmatprep.subr.bf16.mxu0 0
    %62 = vmatpush1.bf16.msra.mxu0 0
    %63 = vmatprep.subr.bf16.mxu0 0
    %64 = vmatpush1.bf16.msra.mxu0 0
    %65 = vmatprep.subr.bf16.mxu0 0
    %66 = vmatpush1.bf16.msra.mxu0 0
    %67 = vmatprep.subr.bf16.mxu0 0
    %68 = vmatpush1.bf16.msra.mxu0 0
    %69 = vmatprep.subr.bf16.mxu0 0
    %70 = vmatpush1.bf16.msra.mxu0 0
    %71 = vmatprep.subr.bf16.mxu0 0
    %72 = vmatpush1.bf16.msra.mxu0 0
    %73 = vmatprep.subr.bf16.mxu0 0
    %74 = vmatpush1.bf16.msra.mxu0 0
    %75 = vmatprep.subr.bf16.mxu0 0
    %76 = vmatpush1.bf16.msra.mxu0 0
    %77 = vmatprep.subr.bf16.mxu0 0
    %78 = vmatpush1.bf16.msra.mxu0 0
    %79 = vmatprep.subr.bf16.mxu0 0
    %80 = vmatpush1.bf16.msra.mxu0 0
    %81 = vmatprep.subr.bf16.mxu0 0
    %82 = vmatpush1.bf16.msra.mxu0 0
    %83 = vmatprep.mubr.bf16.mxu0 0
    %84 = vmatmul.mubr.bf16.gmra.mrb[0].mxu0 %v49
    %v85 = vpop.f32.mrb[0].mxu0
    %v86 = vadd.f32 %v39, %v85
    %v87 = vpop.f32.mrb[0].mxu0
    %v88 = vpop.f32.mrb[0].mxu0
    %v89 = vpop.f32.mrb[0].mxu0
    %90 = vdwg.mxu0
    %v91 = vmax.f32 %v86, 0.0
    %v92 = vpack.c.bf16 %v91, %v91
    %v93 = vld [vmem:[%s4] sm:$0xf]
    %v94 = vld [vmem:[%s4 + $0x4] sm:$0xf]
    %v95 = vld [vmem:[%s4 + $0x8] sm:$0xf]
    %v96 = vld [vmem:[%s4 + $0xc] sm:$0xf]
    %v97 = vld [vmem:[%s5] sm:$0x1]
    %v99 = vlaneseq
    %v100 = vshrl.u32 %v99, 7
    %v101 = vsub.s32 0, %v100
    %v102 = vrot.slane %v97, %v101
    %v108 = vunpack.c.l.b16 %v93
    %v109 = vunpack.c.l.b16 %v94
    %v110 = vunpack.c.l.b16 %v95
    %v111 = vunpack.c.l.b16 %v96
    %v112 = vpack.c.b16 %v109, %v108
    %v113 = vpack.c.b16 %v111, %v110
    %vm116 = vcmask 261120
    %v118 = vsel %vm116, %v92, 0
    %120 = vmatprep.subr.bf16.mxu0 0
    %121 = vmatpush1.bf16.msra.mxu0 %v112
    %122 = vmatprep.subr.bf16.mxu0 0
    %123 = vmatpush1.bf16.msra.mxu0 %v113
    %124 = vmatprep.subr.bf16.mxu0 0
    %125 = vmatpush1.bf16.msra.mxu0 0
    %126 = vmatprep.subr.bf16.mxu0 0
    %127 = vmatpush1.bf16.msra.mxu0 0
    %128 = vmatprep.subr.bf16.mxu0 0
    %129 = vmatpush1.bf16.msra.mxu0 0
    %130 = vmatprep.subr.bf16.mxu0 0
    %131 = vmatpush1.bf16.msra.mxu0 0
    %132 = vmatprep.subr.bf16.mxu0 0
    %133 = vmatpush1.bf16.msra.mxu0 0
    %134 = vmatprep.subr.bf16.mxu0 0
    %135 = vmatpush1.bf16.msra.mxu0 0
    %136 = vmatprep.subr.bf16.mxu0 0
    %137 = vmatpush1.bf16.msra.mxu0 0
    %138 = vmatprep.subr.bf16.mxu0 0
    %139 = vmatpush1.bf16.msra.mxu0 0
    %140 = vmatprep.subr.bf16.mxu0 0
    %141 = vmatpush1.bf16.msra.mxu0 0
    %142 = vmatprep.subr.bf16.mxu0 0
    %143 = vmatpush1.bf16.msra.mxu0 0
    %144 = vmatprep.subr.bf16.mxu0 0
    %145 = vmatpush1.bf16.msra.mxu0 0
    %146 = vmatprep.subr.bf16.mxu0 0
    %147 = vmatpush1.bf16.msra.mxu0 0
    %148 = vmatprep.subr.bf16.mxu0 0
    %149 = vmatpush1.bf16.msra.mxu0 0
    %150 = vmatprep.subr.bf16.mxu0 0
    %151 = vmatpush1.bf16.msra.mxu0 0
    %152 = vmatprep.mubr.bf16.mxu0 0
    %153 = vmatmul.mubr.bf16.gmra.mrb[0].mxu0 %v118
    %v154 = vpop.f32.mrb[0].mxu0
    %v155 = vadd.f32 %v102, %v154
    %v156 = vpop.f32.mrb[0].mxu0
    %v157 = vpop.f32.mrb[0].mxu0
    %v158 = vpop.f32.mrb[0].mxu0
    %159 = vdwg.mxu0
    %v160 = vmax.f32 %v155, 0.0
    %v161 = vpack.c.bf16 %v160, %v160
    %v162 = vld [vmem:[%s6] sm:$0xf]
    %v163 = vld [vmem:[%s6 + $0x4] sm:$0xf]
    %v164 = vld [vmem:[%s6 + $0x8] sm:$0xf]
    %v165 = vld [vmem:[%s6 + $0xc] sm:$0xf]
    %v166 = vld [vmem:[%s7] sm:$0x1]
    %v168 = vlaneseq
    %v169 = vshrl.u32 %v168, 7
    %v170 = vsub.s32 0, %v169
    %v171 = vrot.slane %v166, %v170
    %v177 = vunpack.c.l.b16 %v162
    %v178 = vunpack.c.l.b16 %v163
    %v179 = vunpack.c.l.b16 %v164
    %v180 = vunpack.c.l.b16 %v165
    %v181 = vpack.c.b16 %v178, %v177
    %v182 = vpack.c.b16 %v180, %v179
    %v186 = vsel %vm116, %v161, 0
    %188 = vmatprep.subr.bf16.mxu0 0
    %189 = vmatpush1.bf16.msra.mxu0 %v181
    %190 = vmatprep.subr.bf16.mxu0 0
    %191 = vmatpush1.bf16.msra.mxu0 %v182
    %192 = vmatprep.subr.bf16.mxu0 0
    %193 = vmatpush1.bf16.msra.mxu0 0
    %194 = vmatprep.subr.bf16.mxu0 0
    %195 = vmatpush1.bf16.msra.mxu0 0
    %196 = vmatprep.subr.bf16.mxu0 0
    %197 = vmatpush1.bf16.msra.mxu0 0
    %198 = vmatprep.subr.bf16.mxu0 0
    %199 = vmatpush1.bf16.msra.mxu0 0
    %200 = vmatprep.subr.bf16.mxu0 0
    %201 = vmatpush1.bf16.msra.mxu0 0
    %202 = vmatprep.subr.bf16.mxu0 0
    %203 = vmatpush1.bf16.msra.mxu0 0
    %204 = vmatprep.subr.bf16.mxu0 0
    %205 = vmatpush1.bf16.msra.mxu0 0
    %206 = vmatprep.subr.bf16.mxu0 0
    %207 = vmatpush1.bf16.msra.mxu0 0
    %208 = vmatprep.subr.bf16.mxu0 0
    %209 = vmatpush1.bf16.msra.mxu0 0
    %210 = vmatprep.subr.bf16.mxu0 0
    %211 = vmatpush1.bf16.msra.mxu0 0
    %212 = vmatprep.subr.bf16.mxu0 0
    %213 = vmatpush1.bf16.msra.mxu0 0
    %214 = vmatprep.subr.bf16.mxu0 0
    %215 = vmatpush1.bf16.msra.mxu0 0
    %216 = vmatprep.subr.bf16.mxu0 0
    %217 = vmatpush1.bf16.msra.mxu0 0
    %218 = vmatprep.subr.bf16.mxu0 0
    %219 = vmatpush1.bf16.msra.mxu0 0
    %220 = vmatprep.mubr.bf16.mxu0 0
    %221 = vmatmul.mubr.bf16.gmra.mrb[0].mxu0 %v186
    %v222 = vpop.f32.mrb[0].mxu0
    %v223 = vadd.f32 %v171, %v222
    %v224 = vpop.f32.mrb[0].mxu0
    %v225 = vpop.f32.mrb[0].mxu0
    %v226 = vpop.f32.mrb[0].mxu0
    %227 = vdwg.mxu0
    %v228 = vld [vmem:[%s1] sm:$0xff]
    %vm229 = vcmp.eq.f32.partialorder %v228, 0.0
    %v230 = vsel %vm229, -1e+10, %v223
    %231 = vst [vmem:[#allocation2] sm:$0xff] %v230
    // Predicated region
    $region34: #{mir3_actor_forward.1} parent=1 // pred_check
      _
    $region35: #{mir3_actor_forward.1} parent=1 // pred_check_branch
      %233 = sbr.rel (0) target = $region37
    $region36: #{mir3_actor_forward.1} parent=1 // pred_region
      %s235 = ssub.s32 128, 128
      %236 = vsyncadd [#allocation3], %s235
      %s238 = sshll.u32 [#allocation2], 4
      %s239 = int_to_ptr.vmem [resolvable:$true] %s238
      %241 = dma.vmem_to_hbm [thread:$0]  %s239, 128, %s8, [#allocation3]
    $region37: #{mir3_actor_forward.1} parent=1 // pred_fallthru
      _
    // Predicated region
    $region38: #{mir3_actor_forward.1} parent=1 // pred_check
      _
    $region39: #{mir3_actor_forward.1} parent=1 // pred_check_branch
      %243 = sbr.rel (0) target = $region41
    $region40: #{mir3_actor_forward.1} parent=1 // pred_region
      %244 = dma.done [#allocation3], 128
    $region41: #{mir3_actor_forward.1} parent=1 // pred_fallthru
      _
    %245 = vsyncpa [#allocation3], 1

</llo_original>
